<compile_context>
chip_gen: v6e
topology: v6e:2x2x1
jax: 0.10.0
libtpu: 0.0.40
codegen_flags: <defaults>
</compile_context>

<pallas_src>
import functools

import jax
import jax.numpy as jnp
from jax import lax
from jax.experimental import pallas as pl
from jax.experimental.pallas import tpu as pltpu


def _fusion_kernel(x_ref, wqkv_ref, bqkv_ref, wf_ref, bf_ref, neg_ref, pool_ref,
                   out_ref, o_all_ref, *, tb, m, e, num_heads, head_dim):
    """One grid step: TB batch elements (N = TB*M stacked-modality rows)."""
    n = tb * m

    # Fused QKV projection (bf16 operands, f32 accumulation).  1/sqrt(head_dim)
    # is pre-folded into the Q columns of wqkv / bqkv.
    x = x_ref[...].astype(jnp.bfloat16)                               # [N, E]
    qkv = jnp.dot(x, wqkv_ref[...],
                  preferred_element_type=jnp.float32) + bqkv_ref[...]  # [N, 3E] f32

    neg = neg_ref[...]                           # [N, N] f32 additive block-diag mask
    ones_col = jnp.ones((n, 1), jnp.bfloat16)    # MXU row-sum helper

    dn = (((1,), (1,)), ((), ()))                # contract dim 1 of lhs and rhs (no .T)
    for h in range(num_heads):
        lo = h * head_dim
        qh = qkv[:, lo:lo + head_dim].astype(jnp.bfloat16)            # [N, Dh]
        kh = qkv[:, e + lo:e + lo + head_dim].astype(jnp.bfloat16)
        vh = qkv[:, 2 * e + lo:2 * e + lo + head_dim].astype(jnp.bfloat16)

        s = lax.dot_general(qh, kh, dn,
                            preferred_element_type=jnp.float32) + neg  # [N, N] f32
        s_max = s.max(axis=-1, keepdims=True)                          # keep stabilization
        p = jnp.exp(s - s_max).astype(jnp.bfloat16)                    # masked entries -> 0

        # PV matmul and the softmax denominator both on the MXU (no XLU row-sum,
        # no [N,N] normalize multiply); normalize the small [N, Dh] output instead.
        oh = jnp.dot(p, vh, preferred_element_type=jnp.float32)        # [N, Dh] f32
        denom = jnp.dot(p, ones_col, preferred_element_type=jnp.float32)  # [N, 1] f32
        oh = oh * pl.reciprocal(denom, approx=False)

        o_all_ref[:, lo:lo + head_dim] = oh.astype(jnp.bfloat16)

    # Merged epilogue: one pooling matmul + one fused out-proj matmul.
    pooled = jnp.dot(pool_ref[...], o_all_ref[...],
                     preferred_element_type=jnp.float32)               # [TB, E] f32
    acc = jnp.dot(pooled.astype(jnp.bfloat16), wf_ref[...],
                  preferred_element_type=jnp.float32)                  # [TB, E] f32
    out_ref[...] = (acc + bf_ref[...]).astype(out_ref.dtype)


def _round_up(a, b):
    return ((a + b - 1) // b) * b


def cross_modal_fusion(stacked, params, *, num_heads):
    """stacked: [B, M, E] float32.  params: raw (transposed) torch-style weights."""
    B, M, E = stacked.shape
    head_dim = E // num_heads
    scale = 1.0 / (head_dim ** 0.5)

    # ---- parameter fusion (cheap; would be hoisted/precomputed in practice) ----
    wqkv = jnp.concatenate(
        [params["wq_t"] * scale, params["wk_t"], params["wv_t"]],
        axis=1).astype(jnp.bfloat16)                                   # [E, 3E] bf16
    bqkv = jnp.concatenate(
        [params["bq"] * scale, params["bk"], params["bv"]], axis=1)    # [1, 3E] f32
    # mean over M folded into the fused weight so the pooling matrix is {0,1}.
    wf = ((params["wo_t"] @ params["wp_t"]) / M).astype(jnp.bfloat16)  # [E, E] bf16
    bf = params["bo"] @ params["wp_t"] + params["bp"]                  # [1, E]  f32

    # ---- batch tiling ----
    if B <= 8:
        # single full-batch tile: every block equals the full array (always legal).
        tb, b_pad = B, B
    else:
        # >= 2 grid steps so the "parallel" axis shards across both v7x TCs;
        # tb multiple of 8 keeps both the row tile (tb*M) and output tile (tb)
        # sublane-aligned.  VMEM footprint stays tiny (< 2 MiB) on every gen.
        tb = min(32, _round_up(pl.cdiv(B, 2), 8))
        b_pad = _round_up(B, tb)

    x = stacked
    if b_pad != B:
        x = jnp.concatenate([x, jnp.zeros((b_pad - B, M, E), x.dtype)], axis=0)
    # Flatten (batch, modality) -> rows in the wrapper (free HBM reinterpretation).
    x2d = x.reshape(b_pad * M, E)

    n = tb * M

    # ---- grid-invariant mask / pooling matrix, hoisted out of the kernel ----
    row_b = jnp.arange(n, dtype=jnp.int32) // M
    neg = jnp.where(row_b[:, None] == row_b[None, :], 0.0, -1e30
                    ).astype(jnp.float32)                              # [N, N] additive mask
    pool = (jnp.arange(tb, dtype=jnp.int32)[:, None] == row_b[None, :]
            ).astype(jnp.bfloat16)                                     # [TB, N] {0,1}

    kernel = functools.partial(_fusion_kernel, tb=tb, m=M, e=E,
                               num_heads=num_heads, head_dim=head_dim)

    out = pl.pallas_call(
        kernel,
        out_shape=jax.ShapeDtypeStruct((b_pad, E), stacked.dtype),
        grid_spec=pltpu.PrefetchScalarGridSpec(
            num_scalar_prefetch=0,
            grid=(b_pad // tb,),
            in_specs=[
                pl.BlockSpec((n, E), lambda b: (b, 0)),          # stacked rows
                pl.BlockSpec((E, 3 * E), lambda b: (0, 0)),      # fused QKV weight (bf16)
                pl.BlockSpec((1, 3 * E), lambda b: (0, 0)),      # fused QKV bias (f32)
                pl.BlockSpec((E, E), lambda b: (0, 0)),          # fused Wo@Wp / M (bf16)
                pl.BlockSpec((1, E), lambda b: (0, 0)),          # fused bias (f32)
                pl.BlockSpec((n, n), lambda b: (0, 0)),          # block-diag mask (f32)
                pl.BlockSpec((tb, n), lambda b: (0, 0)),         # pooling matrix (bf16)
            ],
            out_specs=pl.BlockSpec((tb, E), lambda b: (b, 0)),
            scratch_shapes=[pltpu.VMEM((n, E), jnp.bfloat16)],   # merged per-head outputs
        ),
        compiler_params=pltpu.CompilerParams(
            dimension_semantics=("parallel",)),
    )(x2d, wqkv, bqkv, wf, bf, neg, pool)

    return out[:B]


def _reference(stacked, params, *, num_heads):
    """Pure-JAX f32 reference mirroring torch.nn.MultiheadAttention + mean + Linear
    (unfused math, so it also validates the QKV / Wo·Wp / 1/M fusions)."""
    B, M, E = stacked.shape
    Dh = E // num_heads
    scale = 1.0 / (Dh ** 0.5)
    q = stacked @ params["wq_t"] + params["bq"]
    k = stacked @ params["wk_t"] + params["bk"]
    v = stacked @ params["wv_t"] + params["bv"]
    qh = q.reshape(B, M, num_heads, Dh).transpose(0, 2, 1, 3)
    kh = k.reshape(B, M, num_heads, Dh).transpose(0, 2, 1, 3)
    vh = v.reshape(B, M, num_heads, Dh).transpose(0, 2, 1, 3)
    s = jnp.einsum("bhqd,bhkd->bhqk", qh * scale, kh)
    p = jax.nn.softmax(s, axis=-1)
    o = jnp.einsum("bhqk,bhkd->bhqd", p, vh).transpose(0, 2, 1, 3).reshape(B, M, E)
    attn = o @ params["wo_t"] + params["bo"]
    mean = attn.mean(axis=1)
    return mean @ params["wp_t"] + params["bp"]


if __name__ == "__main__":
    EMBED_DIM = 128
    NUM_HEADS = 4
    BATCH = 2
    NUM_MODALITIES = 4   # len(inputs) -> stacked seq dim M

    key = jax.random.PRNGKey(0)
    keys = jax.random.split(key, 16)

    E = EMBED_DIM
    sc = 1.0 / (E ** 0.5)
    # Deterministic synthetic parameters (shapes per nn.MultiheadAttention / nn.Linear).
    params = {
        "wq_t": jax.random.normal(keys[0], (E, E), jnp.float32) * sc,   # in_proj[:E].T
        "bq":   jax.random.normal(keys[1], (1, E), jnp.float32) * 0.01,
        "wk_t": jax.random.normal(keys[2], (E, E), jnp.float32) * sc,   # in_proj[E:2E].T
        "bk":   jax.random.normal(keys[3], (1, E), jnp.float32) * 0.01,
        "wv_t": jax.random.normal(keys[4], (E, E), jnp.float32) * sc,   # in_proj[2E:].T
        "bv":   jax.random.normal(keys[5], (1, E), jnp.float32) * 0.01,
        "wo_t": jax.random.normal(keys[6], (E, E), jnp.float32) * sc,   # out_proj.weight.T
        "bo":   jax.random.normal(keys[7], (1, E), jnp.float32) * 0.01,
        "wp_t": jax.random.normal(keys[8], (E, E), jnp.float32) * sc,   # proj.weight.T
        "bp":   jax.random.normal(keys[9], (1, E), jnp.float32) * 0.01,
    }

    # inputs: list of NUM_MODALITIES tensors of shape [B, E]; stack(dim=1) -> [B, M, E]
    inputs = [jax.random.normal(keys[10 + i], (BATCH, E), jnp.float32) * (i + 1) * 0.1
              for i in range(NUM_MODALITIES)]
    stacked = jnp.stack(inputs, axis=1)   # [B, M, E]

    out = cross_modal_fusion(stacked, params, num_heads=NUM_HEADS)
    out = jax.block_until_ready(out)

    ref = _reference(stacked, params, num_heads=NUM_HEADS)
    assert out.shape == (BATCH, EMBED_DIM)
    # bf16 MXU operands (f32 accumulation): tolerance relaxed from 1e-4 to ~1e-3.
    assert jnp.allclose(out, ref, atol=2e-3, rtol=2e-3), "mismatch vs JAX reference"

    print("KERNEL_OK")
</pallas_src>

<mosaic_0001>
module attributes {stable_mosaic.version = 11 : i64} {
  func.func @_fusion_kernel(%arg0: i32, %arg1: memref<8x128xf32, #tpu.memory_space<vmem>>, %arg2: memref<128x384xbf16, #tpu.memory_space<vmem>>, %arg3: memref<1x384xf32, #tpu.memory_space<vmem>>, %arg4: memref<128x128xbf16, #tpu.memory_space<vmem>>, %arg5: memref<1x128xf32, #tpu.memory_space<vmem>>, %arg6: memref<8x8xf32, #tpu.memory_space<vmem>>, %arg7: memref<2x8xbf16, #tpu.memory_space<vmem>>, %arg8: memref<2x128xf32, #tpu.memory_space<vmem>>, %arg9: memref<8x128xbf16, #tpu.memory_space<vmem>>) attributes {dimension_semantics = [#tpu.dimension_semantics<parallel>], iteration_bounds = array<i64: 1>, scalar_prefetch = 0 : i64, scratch_operands = 1 : i64, tpu.core_type = #tpu.core_type<tc>, window_params = [{transform_indices = @transform_0, window_bounds = array<i64: 8, 128>}, {pipeline_mode = #tpu.pipeline_mode<synchronous>, transform_indices = @transform_1, window_bounds = array<i64: 128, 384>}, {pipeline_mode = #tpu.pipeline_mode<synchronous>, transform_indices = @transform_2, window_bounds = array<i64: 1, 384>}, {pipeline_mode = #tpu.pipeline_mode<synchronous>, transform_indices = @transform_3, window_bounds = array<i64: 128, 128>}, {pipeline_mode = #tpu.pipeline_mode<synchronous>, transform_indices = @transform_4, window_bounds = array<i64: 1, 128>}, {pipeline_mode = #tpu.pipeline_mode<synchronous>, transform_indices = @transform_5, window_bounds = array<i64: 8, 8>}, {pipeline_mode = #tpu.pipeline_mode<synchronous>, transform_indices = @transform_6, window_bounds = array<i64: 2, 8>}, {transform_indices = @transform_7, window_bounds = array<i64: 2, 128>}]} {
    %c0 = arith.constant 0 : index
    %c0_0 = arith.constant 0 : index
    %0 = vector.load %arg1[%c0, %c0_0] : memref<8x128xf32, #tpu.memory_space<vmem>>, vector<8x128xf32>
    %1 = arith.truncf %0 : vector<8x128xf32> to vector<8x128xbf16>
    %c0_1 = arith.constant 0 : index
    %c0_2 = arith.constant 0 : index
    %2 = vector.load %arg2[%c0_1, %c0_2] : memref<128x384xbf16, #tpu.memory_space<vmem>>, vector<128x384xbf16>
    %cst = arith.constant dense<0.000000e+00> : vector<8x384xf32>
    %3 = tpu.matmul %1, %2, %cst {dimension_numbers = #tpu.dot_dimension_numbers<[1], [0], [0], [1], [0, 0, 1, 1], [], []>} : vector<8x128xbf16>, vector<128x384xbf16>, vector<8x384xf32> -> vector<8x384xf32>
    %c0_3 = arith.constant 0 : index
    %c0_4 = arith.constant 0 : index
    %4 = vector.load %arg3[%c0_3, %c0_4] : memref<1x384xf32, #tpu.memory_space<vmem>>, vector<1x384xf32>
    %5 = vector.broadcast %4 : vector<1x384xf32> to vector<8x384xf32>
    %6 = arith.addf %3, %5 : vector<8x384xf32>
    %c0_5 = arith.constant 0 : index
    %c0_6 = arith.constant 0 : index
    %7 = vector.load %arg6[%c0_5, %c0_6] : memref<8x8xf32, #tpu.memory_space<vmem>>, vector<8x8xf32>
    %cst_7 = arith.constant 1.000000e+00 : bf16
    %8 = vector.broadcast %cst_7 : bf16 to vector<8x1xbf16>
    %9 = vector.extract_strided_slice %6 {offsets = [0, 0], sizes = [8, 32], strides = [1, 1]} : vector<8x384xf32> to vector<8x32xf32>
    %10 = arith.truncf %9 : vector<8x32xf32> to vector<8x32xbf16>
    %11 = vector.extract_strided_slice %6 {offsets = [0, 128], sizes = [8, 32], strides = [1, 1]} : vector<8x384xf32> to vector<8x32xf32>
    %12 = arith.truncf %11 : vector<8x32xf32> to vector<8x32xbf16>
    %13 = vector.extract_strided_slice %6 {offsets = [0, 256], sizes = [8, 32], strides = [1, 1]} : vector<8x384xf32> to vector<8x32xf32>
    %14 = arith.truncf %13 : vector<8x32xf32> to vector<8x32xbf16>
    %cst_8 = arith.constant dense<0.000000e+00> : vector<8x8xf32>
    %15 = tpu.matmul %10, %12, %cst_8 {dimension_numbers = #tpu.dot_dimension_numbers<[1], [1], [0], [0], [0, 0, 1, 0], [], []>} : vector<8x32xbf16>, vector<8x32xbf16>, vector<8x8xf32> -> vector<8x8xf32>
    %16 = arith.addf %15, %7 : vector<8x8xf32>
    %cst_9 = arith.constant dense<0xFF800000> : vector<8xf32>
    %17 = vector.multi_reduction <maximumf>, %16, %cst_9 [1] : vector<8x8xf32> to vector<8xf32>
    %18 = vector.shape_cast %17 : vector<8xf32> to vector<8x1xf32>
    %19 = vector.broadcast %18 : vector<8x1xf32> to vector<8x8xf32>
    %20 = arith.subf %16, %19 : vector<8x8xf32>
    %21 = math.exp %20 : vector<8x8xf32>
    %22 = arith.truncf %21 : vector<8x8xf32> to vector<8x8xbf16>
    %cst_10 = arith.constant dense<0.000000e+00> : vector<8x32xf32>
    %23 = tpu.matmul %22, %14, %cst_10 {dimension_numbers = #tpu.dot_dimension_numbers<[1], [0], [0], [1], [0, 0, 1, 1], [], []>} : vector<8x8xbf16>, vector<8x32xbf16>, vector<8x32xf32> -> vector<8x32xf32>
    %cst_11 = arith.constant dense<0.000000e+00> : vector<8x1xf32>
    %24 = tpu.matmul %22, %8, %cst_11 {dimension_numbers = #tpu.dot_dimension_numbers<[1], [0], [0], [1], [0, 0, 1, 1], [], []>} : vector<8x8xbf16>, vector<8x1xbf16>, vector<8x1xf32> -> vector<8x1xf32>
    %25 = tpu.reciprocal %24 : vector<8x1xf32> -> vector<8x1xf32>
    %26 = vector.broadcast %25 : vector<8x1xf32> to vector<8x32xf32>
    %27 = arith.mulf %23, %26 : vector<8x32xf32>
    %28 = arith.truncf %27 : vector<8x32xf32> to vector<8x32xbf16>
    %c0_12 = arith.constant 0 : index
    %c0_13 = arith.constant 0 : index
    %29 = vector.load %arg9[%c0_12, %c0_13] : memref<8x128xbf16, #tpu.memory_space<vmem>>, vector<8x32xbf16>
    tpu.vector_store %arg9[%c0_12, %c0_13], %28 {strides = array<i32>} : memref<8x128xbf16, #tpu.memory_space<vmem>>, vector<8x32xbf16>,
    %30 = vector.extract_strided_slice %6 {offsets = [0, 32], sizes = [8, 32], strides = [1, 1]} : vector<8x384xf32> to vector<8x32xf32>
    %31 = arith.truncf %30 : vector<8x32xf32> to vector<8x32xbf16>
    %32 = vector.extract_strided_slice %6 {offsets = [0, 160], sizes = [8, 32], strides = [1, 1]} : vector<8x384xf32> to vector<8x32xf32>
    %33 = arith.truncf %32 : vector<8x32xf32> to vector<8x32xbf16>
    %34 = vector.extract_strided_slice %6 {offsets = [0, 288], sizes = [8, 32], strides = [1, 1]} : vector<8x384xf32> to vector<8x32xf32>
    %35 = arith.truncf %34 : vector<8x32xf32> to vector<8x32xbf16>
    %cst_14 = arith.constant dense<0.000000e+00> : vector<8x8xf32>
    %36 = tpu.matmul %31, %33, %cst_14 {dimension_numbers = #tpu.dot_dimension_numbers<[1], [1], [0], [0], [0, 0, 1, 0], [], []>} : vector<8x32xbf16>, vector<8x32xbf16>, vector<8x8xf32> -> vector<8x8xf32>
    %37 = arith.addf %36, %7 : vector<8x8xf32>
    %cst_15 = arith.constant dense<0xFF800000> : vector<8xf32>
    %38 = vector.multi_reduction <maximumf>, %37, %cst_15 [1] : vector<8x8xf32> to vector<8xf32>
    %39 = vector.shape_cast %38 : vector<8xf32> to vector<8x1xf32>
    %40 = vector.broadcast %39 : vector<8x1xf32> to vector<8x8xf32>
    %41 = arith.subf %37, %40 : vector<8x8xf32>
    %42 = math.exp %41 : vector<8x8xf32>
    %43 = arith.truncf %42 : vector<8x8xf32> to vector<8x8xbf16>
    %cst_16 = arith.constant dense<0.000000e+00> : vector<8x32xf32>
    %44 = tpu.matmul %43, %35, %cst_16 {dimension_numbers = #tpu.dot_dimension_numbers<[1], [0], [0], [1], [0, 0, 1, 1], [], []>} : vector<8x8xbf16>, vector<8x32xbf16>, vector<8x32xf32> -> vector<8x32xf32>
    %cst_17 = arith.constant dense<0.000000e+00> : vector<8x1xf32>
    %45 = tpu.matmul %43, %8, %cst_17 {dimension_numbers = #tpu.dot_dimension_numbers<[1], [0], [0], [1], [0, 0, 1, 1], [], []>} : vector<8x8xbf16>, vector<8x1xbf16>, vector<8x1xf32> -> vector<8x1xf32>
    %46 = tpu.reciprocal %45 : vector<8x1xf32> -> vector<8x1xf32>
    %47 = vector.broadcast %46 : vector<8x1xf32> to vector<8x32xf32>
    %48 = arith.mulf %44, %47 : vector<8x32xf32>
    %49 = arith.truncf %48 : vector<8x32xf32> to vector<8x32xbf16>
    %c0_18 = arith.constant 0 : index
    %c32 = arith.constant 32 : index
    %50 = vector.load %arg9[%c0_18, %c32] : memref<8x128xbf16, #tpu.memory_space<vmem>>, vector<8x32xbf16>
    tpu.vector_store %arg9[%c0_18, %c32], %49 {strides = array<i32>} : memref<8x128xbf16, #tpu.memory_space<vmem>>, vector<8x32xbf16>,
    %51 = vector.extract_strided_slice %6 {offsets = [0, 64], sizes = [8, 32], strides = [1, 1]} : vector<8x384xf32> to vector<8x32xf32>
    %52 = arith.truncf %51 : vector<8x32xf32> to vector<8x32xbf16>
    %53 = vector.extract_strided_slice %6 {offsets = [0, 192], sizes = [8, 32], strides = [1, 1]} : vector<8x384xf32> to vector<8x32xf32>
    %54 = arith.truncf %53 : vector<8x32xf32> to vector<8x32xbf16>
    %55 = vector.extract_strided_slice %6 {offsets = [0, 320], sizes = [8, 32], strides = [1, 1]} : vector<8x384xf32> to vector<8x32xf32>
    %56 = arith.truncf %55 : vector<8x32xf32> to vector<8x32xbf16>
    %cst_19 = arith.constant dense<0.000000e+00> : vector<8x8xf32>
    %57 = tpu.matmul %52, %54, %cst_19 {dimension_numbers = #tpu.dot_dimension_numbers<[1], [1], [0], [0], [0, 0, 1, 0], [], []>} : vector<8x32xbf16>, vector<8x32xbf16>, vector<8x8xf32> -> vector<8x8xf32>
    %58 = arith.addf %57, %7 : vector<8x8xf32>
    %cst_20 = arith.constant dense<0xFF800000> : vector<8xf32>
    %59 = vector.multi_reduction <maximumf>, %58, %cst_20 [1] : vector<8x8xf32> to vector<8xf32>
    %60 = vector.shape_cast %59 : vector<8xf32> to vector<8x1xf32>
    %61 = vector.broadcast %60 : vector<8x1xf32> to vector<8x8xf32>
    %62 = arith.subf %58, %61 : vector<8x8xf32>
    %63 = math.exp %62 : vector<8x8xf32>
    %64 = arith.truncf %63 : vector<8x8xf32> to vector<8x8xbf16>
    %cst_21 = arith.constant dense<0.000000e+00> : vector<8x32xf32>
    %65 = tpu.matmul %64, %56, %cst_21 {dimension_numbers = #tpu.dot_dimension_numbers<[1], [0], [0], [1], [0, 0, 1, 1], [], []>} : vector<8x8xbf16>, vector<8x32xbf16>, vector<8x32xf32> -> vector<8x32xf32>
    %cst_22 = arith.constant dense<0.000000e+00> : vector<8x1xf32>
    %66 = tpu.matmul %64, %8, %cst_22 {dimension_numbers = #tpu.dot_dimension_numbers<[1], [0], [0], [1], [0, 0, 1, 1], [], []>} : vector<8x8xbf16>, vector<8x1xbf16>, vector<8x1xf32> -> vector<8x1xf32>
    %67 = tpu.reciprocal %66 : vector<8x1xf32> -> vector<8x1xf32>
    %68 = vector.broadcast %67 : vector<8x1xf32> to vector<8x32xf32>
    %69 = arith.mulf %65, %68 : vector<8x32xf32>
    %70 = arith.truncf %69 : vector<8x32xf32> to vector<8x32xbf16>
    %c0_23 = arith.constant 0 : index
    %c64 = arith.constant 64 : index
    %71 = vector.load %arg9[%c0_23, %c64] : memref<8x128xbf16, #tpu.memory_space<vmem>>, vector<8x32xbf16>
    tpu.vector_store %arg9[%c0_23, %c64], %70 {strides = array<i32>} : memref<8x128xbf16, #tpu.memory_space<vmem>>, vector<8x32xbf16>,
    %72 = vector.extract_strided_slice %6 {offsets = [0, 96], sizes = [8, 32], strides = [1, 1]} : vector<8x384xf32> to vector<8x32xf32>
    %73 = arith.truncf %72 : vector<8x32xf32> to vector<8x32xbf16>
    %74 = vector.extract_strided_slice %6 {offsets = [0, 224], sizes = [8, 32], strides = [1, 1]} : vector<8x384xf32> to vector<8x32xf32>
    %75 = arith.truncf %74 : vector<8x32xf32> to vector<8x32xbf16>
    %76 = vector.extract_strided_slice %6 {offsets = [0, 352], sizes = [8, 32], strides = [1, 1]} : vector<8x384xf32> to vector<8x32xf32>
    %77 = arith.truncf %76 : vector<8x32xf32> to vector<8x32xbf16>
    %cst_24 = arith.constant dense<0.000000e+00> : vector<8x8xf32>
    %78 = tpu.matmul %73, %75, %cst_24 {dimension_numbers = #tpu.dot_dimension_numbers<[1], [1], [0], [0], [0, 0, 1, 0], [], []>} : vector<8x32xbf16>, vector<8x32xbf16>, vector<8x8xf32> -> vector<8x8xf32>
    %79 = arith.addf %78, %7 : vector<8x8xf32>
    %cst_25 = arith.constant dense<0xFF800000> : vector<8xf32>
    %80 = vector.multi_reduction <maximumf>, %79, %cst_25 [1] : vector<8x8xf32> to vector<8xf32>
    %81 = vector.shape_cast %80 : vector<8xf32> to vector<8x1xf32>
    %82 = vector.broadcast %81 : vector<8x1xf32> to vector<8x8xf32>
    %83 = arith.subf %79, %82 : vector<8x8xf32>
    %84 = math.exp %83 : vector<8x8xf32>
    %85 = arith.truncf %84 : vector<8x8xf32> to vector<8x8xbf16>
    %cst_26 = arith.constant dense<0.000000e+00> : vector<8x32xf32>
    %86 = tpu.matmul %85, %77, %cst_26 {dimension_numbers = #tpu.dot_dimension_numbers<[1], [0], [0], [1], [0, 0, 1, 1], [], []>} : vector<8x8xbf16>, vector<8x32xbf16>, vector<8x32xf32> -> vector<8x32xf32>
    %cst_27 = arith.constant dense<0.000000e+00> : vector<8x1xf32>
    %87 = tpu.matmul %85, %8, %cst_27 {dimension_numbers = #tpu.dot_dimension_numbers<[1], [0], [0], [1], [0, 0, 1, 1], [], []>} : vector<8x8xbf16>, vector<8x1xbf16>, vector<8x1xf32> -> vector<8x1xf32>
    %88 = tpu.reciprocal %87 : vector<8x1xf32> -> vector<8x1xf32>
    %89 = vector.broadcast %88 : vector<8x1xf32> to vector<8x32xf32>
    %90 = arith.mulf %86, %89 : vector<8x32xf32>
    %91 = arith.truncf %90 : vector<8x32xf32> to vector<8x32xbf16>
    %c0_28 = arith.constant 0 : index
    %c96 = arith.constant 96 : index
    %92 = vector.load %arg9[%c0_28, %c96] : memref<8x128xbf16, #tpu.memory_space<vmem>>, vector<8x32xbf16>
    tpu.vector_store %arg9[%c0_28, %c96], %91 {strides = array<i32>} : memref<8x128xbf16, #tpu.memory_space<vmem>>, vector<8x32xbf16>,
    %c0_29 = arith.constant 0 : index
    %c0_30 = arith.constant 0 : index
    %93 = vector.load %arg7[%c0_29, %c0_30] : memref<2x8xbf16, #tpu.memory_space<vmem>>, vector<2x8xbf16>
    %c0_31 = arith.constant 0 : index
    %c0_32 = arith.constant 0 : index
    %94 = vector.load %arg9[%c0_31, %c0_32] : memref<8x128xbf16, #tpu.memory_space<vmem>>, vector<8x128xbf16>
    %cst_33 = arith.constant dense<0.000000e+00> : vector<2x128xf32>
    %95 = tpu.matmul %93, %94, %cst_33 {dimension_numbers = #tpu.dot_dimension_numbers<[1], [0], [0], [1], [0, 0, 1, 1], [], []>} : vector<2x8xbf16>, vector<8x128xbf16>, vector<2x128xf32> -> vector<2x128xf32>
    %96 = arith.truncf %95 : vector<2x128xf32> to vector<2x128xbf16>
    %c0_34 = arith.constant 0 : index
    %c0_35 = arith.constant 0 : index
    %97 = vector.load %arg4[%c0_34, %c0_35] : memref<128x128xbf16, #tpu.memory_space<vmem>>, vector<128x128xbf16>
    %cst_36 = arith.constant dense<0.000000e+00> : vector<2x128xf32>
    %98 = tpu.matmul %96, %97, %cst_36 {dimension_numbers = #tpu.dot_dimension_numbers<[1], [0], [0], [1], [0, 0, 1, 1], [], []>} : vector<2x128xbf16>, vector<128x128xbf16>, vector<2x128xf32> -> vector<2x128xf32>
    %c0_37 = arith.constant 0 : index
    %c0_38 = arith.constant 0 : index
    %99 = vector.load %arg5[%c0_37, %c0_38] : memref<1x128xf32, #tpu.memory_space<vmem>>, vector<1x128xf32>
    %100 = vector.broadcast %99 : vector<1x128xf32> to vector<2x128xf32>
    %101 = arith.addf %98, %100 : vector<2x128xf32>
    %c0_39 = arith.constant 0 : index
    %c0_40 = arith.constant 0 : index
    %102 = vector.load %arg8[%c0_39, %c0_40] : memref<2x128xf32, #tpu.memory_space<vmem>>, vector<2x128xf32>
    tpu.vector_store %arg8[%c0_39, %c0_40], %101 {strides = array<i32>} : memref<2x128xf32, #tpu.memory_space<vmem>>, vector<2x128xf32>,
    return
  }
  func.func @transform_0(%arg0: i32) -> (i32, i32) {
    %c0_i32 = arith.constant 0 : i32
    %c0_i32_0 = arith.constant 0 : i32
    return %arg0, %c0_i32 : i32, i32
  }
  func.func @transform_1(%arg0: i32) -> (i32, i32) {
    %c0_i32 = arith.constant 0 : i32
    %c0_i32_0 = arith.constant 0 : i32
    %c0_i32_1 = arith.constant 0 : i32
    return %c0_i32, %c0_i32_0 : i32, i32
  }
  func.func @transform_2(%arg0: i32) -> (i32, i32) {
    %c0_i32 = arith.constant 0 : i32
    %c0_i32_0 = arith.constant 0 : i32
    %c0_i32_1 = arith.constant 0 : i32
    return %c0_i32, %c0_i32_0 : i32, i32
  }
  func.func @transform_3(%arg0: i32) -> (i32, i32) {
    %c0_i32 = arith.constant 0 : i32
    %c0_i32_0 = arith.constant 0 : i32
    %c0_i32_1 = arith.constant 0 : i32
    return %c0_i32, %c0_i32_0 : i32, i32
  }
  func.func @transform_4(%arg0: i32) -> (i32, i32) {
    %c0_i32 = arith.constant 0 : i32
    %c0_i32_0 = arith.constant 0 : i32
    %c0_i32_1 = arith.constant 0 : i32
    return %c0_i32, %c0_i32_0 : i32, i32
  }
  func.func @transform_5(%arg0: i32) -> (i32, i32) {
    %c0_i32 = arith.constant 0 : i32
    %c0_i32_0 = arith.constant 0 : i32
    %c0_i32_1 = arith.constant 0 : i32
    return %c0_i32, %c0_i32_0 : i32, i32
  }
  func.func @transform_6(%arg0: i32) -> (i32, i32) {
    %c0_i32 = arith.constant 0 : i32
    %c0_i32_0 = arith.constant 0 : i32
    %c0_i32_1 = arith.constant 0 : i32
    return %c0_i32, %c0_i32_0 : i32, i32
  }
  func.func @transform_7(%arg0: i32) -> (i32, i32) {
    %c0_i32 = arith.constant 0 : i32
    %c0_i32_0 = arith.constant 0 : i32
    return %arg0, %c0_i32 : i32, i32
  }
}

</mosaic_0001>

<llo_original>
// kernel: tpu_custom_call.1
$region0: #{tpu_custom_call.1}
  #allocation0 [shape = 'u32[]', space=smem, size = 0x4, offset = 0x4, fixed_abs, tag = 'smem constant byte address 0x4 - core index']
  #allocation1 [shape = 'u32[144,128]{1,0:T(1,128)}', space=vmem, size = 0x12000, scoped, tag = 'internal scratch']
  #allocation2 [shape = 'bf16[8,128]{1,0:T(8,128)(2,1)}', space=vmem, size = 0x800, scoped, tag = 'scratch operand']
  %s0 = inlined_call_operand.hbm [shape: f32[8,128], index: 0, kind: input, shape index: {}]
  %s1 = inlined_call_operand.hbm [shape: bf16[128,384], index: 1, kind: input, shape index: {}]
  %s2 = inlined_call_operand.hbm [shape: f32[1,384], index: 2, kind: input, shape index: {}]
  %s3 = inlined_call_operand.hbm [shape: bf16[128,128], index: 3, kind: input, shape index: {}]
  %s4 = inlined_call_operand.vmem [shape: f32[1,128], index: 4, kind: input, shape index: {}]
  %s5 = inlined_call_operand.vmem [shape: f32[8,8], index: 5, kind: input, shape index: {}]
  %s6 = inlined_call_operand.vmem [shape: bf16[2,8], index: 6, kind: input, shape index: {}]
  %s7 = inlined_call_operand.hbm [shape: f32[2,128], index: 7, kind: output, shape index: {}]
  %s8 = sld [smem:[#allocation0]]
  $region54: #{tpu_custom_call.1} parent=0
    _
  %s10 = ssub.s32 1, %s8
  %s11 = scalar_select 0, %s10, %s8
  $region1: #{tpu_custom_call.1} parent=0
    #allocation3 [shape = 'u8[4096]{0}', space=vmem, size = 0x1000, scoped, tag = 'input window, operand 0, single buffered']
    #allocation4 [shape = 's32[1]{0}', space=sflag, size = 0x4, scoped, tag = 'scoped memory for tpu_custom_call.1']
    #allocation5 [shape = 's32[1]{0}', space=sflag, size = 0x4, scoped, tag = 'scoped memory for tpu_custom_call.1']
    #allocation6 [shape = 'u8[98304]{0}', space=vmem, size = 0x18000, scoped, tag = 'input window, operand 1, single buffered']
    #allocation7 [shape = 's32[1]{0}', space=sflag, size = 0x4, scoped, tag = 'scoped memory for tpu_custom_call.1']
    #allocation8 [shape = 'u8[1536]{0}', space=vmem, size = 0x800, scoped, tag = 'input window, operand 2, single buffered']
    #allocation9 [shape = 'u8[32768]{0}', space=vmem, size = 0x8000, scoped, tag = 'input window, operand 3, single buffered']
    #allocation10 [shape = 's32[1]{0}', space=sflag, size = 0x4, scoped, tag = 'scoped memory for tpu_custom_call.1']
    #allocation11 [shape = 'u8[1024]{0}', space=vmem, size = 0x400, scoped, tag = 'output window, operand 0, single buffered']
    %12 = vsyncpa [#allocation4], 0
    %13 = vsyncpa [#allocation7], 0
    %14 = vsyncpa [#allocation10], 0
    %15 = vsyncpa [#allocation5], 0
    // Predicated region
    $region2: #{tpu_custom_call.1} parent=1 // pred_check
      _
    $region3: #{tpu_custom_call.1} parent=1 // pred_check_branch
      %17 = sbr.rel (0) target = $region5
    $region4: #{tpu_custom_call.1} parent=1 // pred_region
      %s19 = ssub.s32 128, 128
      %20 = vsyncadd [#allocation4], %s19
      %s22 = sshll.u32 [#allocation3], 4
      %s23 = int_to_ptr.vmem [resolvable:$true] %s22
      %25 = dma.hbm_to_vmem [thread:$0]  %s0, 128, %s23, [#allocation4]
    $region5: #{tpu_custom_call.1} parent=1 // pred_fallthru
      _
    // Predicated region
    $region6: #{tpu_custom_call.1} parent=1 // pred_check
      _
    $region7: #{tpu_custom_call.1} parent=1 // pred_check_branch
      %27 = sbr.rel (0) target = $region9
    $region8: #{tpu_custom_call.1} parent=1 // pred_region
      %s29 = ssub.s32 3072, 3072
      %30 = vsyncadd [#allocation7], %s29
      %s31 = sshll.u32 [#allocation6], 4
      %s32 = int_to_ptr.vmem [resolvable:$true] %s31
      %37 = dma.hbm_to_vmem [thread:$0]  %s1, 3072, %s32, [#allocation7], 192, 192, 12
    $region9: #{tpu_custom_call.1} parent=1 // pred_fallthru
      _
    // Predicated region
    $region10: #{tpu_custom_call.1} parent=1 // pred_check
      _
    $region11: #{tpu_custom_call.1} parent=1 // pred_check_branch
      %39 = sbr.rel (0) target = $region13
    $region12: #{tpu_custom_call.1} parent=1 // pred_region
      %s41 = ssub.s32 48, 48
      %42 = vsyncadd [#allocation7], %s41
      %s44 = sshll.u32 [#allocation8], 4
      %s45 = int_to_ptr.vmem [resolvable:$true] %s44
      %47 = dma.hbm_to_vmem [thread:$0]  %s2, 48, %s45, [#allocation7]
    $region13: #{tpu_custom_call.1} parent=1 // pred_fallthru
      _
    // Predicated region
    $region14: #{tpu_custom_call.1} parent=1 // pred_check
      _
    $region15: #{tpu_custom_call.1} parent=1 // pred_check_branch
      %49 = sbr.rel (0) target = $region17
    $region16: #{tpu_custom_call.1} parent=1 // pred_region
      %s51 = ssub.s32 1024, 1024
      %52 = vsyncadd [#allocation10], %s51
      %s53 = sshll.u32 [#allocation9], 4
      %s54 = int_to_ptr.vmem [resolvable:$true] %s53
      %59 = dma.hbm_to_vmem [thread:$0]  %s3, 1024, %s54, [#allocation10], 64, 64, 4
    $region17: #{tpu_custom_call.1} parent=1 // pred_fallthru
      _
    // Predicated region
    $region18: #{tpu_custom_call.1} parent=1 // pred_check
      _
    $region19: #{tpu_custom_call.1} parent=1 // pred_check_branch
      %61 = sbr.rel (0) target = $region21
    $region20: #{tpu_custom_call.1} parent=1 // pred_region
      _
    $region21: #{tpu_custom_call.1} parent=1 // pred_fallthru
      _
    // Predicated region
    $region22: #{tpu_custom_call.1} parent=1 // pred_check
      _
    $region23: #{tpu_custom_call.1} parent=1 // pred_check_branch
      %63 = sbr.rel (0) target = $region25
    $region24: #{tpu_custom_call.1} parent=1 // pred_region
      _
    $region25: #{tpu_custom_call.1} parent=1 // pred_fallthru
      _
    // Predicated region
    $region26: #{tpu_custom_call.1} parent=1 // pred_check
      _
    $region27: #{tpu_custom_call.1} parent=1 // pred_check_branch
      %65 = sbr.rel (0) target = $region29
    $region28: #{tpu_custom_call.1} parent=1 // pred_region
      _
    $region29: #{tpu_custom_call.1} parent=1 // pred_fallthru
      _
    // Predicated region
    $region30: #{tpu_custom_call.1} parent=1 // pred_check
      _
    $region31: #{tpu_custom_call.1} parent=1 // pred_check_branch
      %67 = sbr.rel (0) target = $region33
    $region32: #{tpu_custom_call.1} parent=1 // pred_region
      %68 = dma.done [#allocation4], 128
    $region33: #{tpu_custom_call.1} parent=1 // pred_fallthru
      _
    // Predicated region
    $region34: #{tpu_custom_call.1} parent=1 // pred_check
      _
    $region35: #{tpu_custom_call.1} parent=1 // pred_check_branch
      %70 = sbr.rel (0) target = $region37
    $region36: #{tpu_custom_call.1} parent=1 // pred_region
      %71 = dma.done [#allocation7], 3072
    $region37: #{tpu_custom_call.1} parent=1 // pred_fallthru
      _
    // Predicated region
    $region38: #{tpu_custom_call.1} parent=1 // pred_check
      _
    $region39: #{tpu_custom_call.1} parent=1 // pred_check_branch
      %73 = sbr.rel (0) target = $region41
    $region40: #{tpu_custom_call.1} parent=1 // pred_region
      %74 = dma.done [#allocation7], 48
    $region41: #{tpu_custom_call.1} parent=1 // pred_fallthru
      _
    // Predicated region
    $region42: #{tpu_custom_call.1} parent=1 // pred_check
      _
    $region43: #{tpu_custom_call.1} parent=1 // pred_check_branch
      %76 = sbr.rel (0) target = $region45
    $region44: #{tpu_custom_call.1} parent=1 // pred_region
      %77 = dma.done [#allocation10], 1024
    $region45: #{tpu_custom_call.1} parent=1 // pred_fallthru
      _
    %v80 = vld [vmem:[#allocation3] sm:$0xff]
    %v81 = vpack.c.bf16 %v80, %v80
    %v82 = vld [vmem:[#allocation6] sm:$0xff]
    %v83 = vld [vmem:[#allocation6 + $0x8] sm:$0xf]
    %v84 = vld [vmem:[#allocation6 + $0xc] sm:$0xff]
    %v85 = vld [vmem:[#allocation6 + $0x14] sm:$0xf]
    %v86 = vld [vmem:[#allocation6 + $0x18] sm:$0xff]
    %v87 = vld [vmem:[#allocation6 + $0x20] sm:$0xf]
    %v88 = vld [vmem:[#allocation6 + $0x24] sm:$0xff]
    %v89 = vld [vmem:[#allocation6 + $0x2c] sm:$0xf]
    %v90 = vld [vmem:[#allocation6 + $0x30] sm:$0xff]
    %v91 = vld [vmem:[#allocation6 + $0x38] sm:$0xf]
    %v92 = vld [vmem:[#allocation6 + $0x3c] sm:$0xff]
    %v93 = vld [vmem:[#allocation6 + $0x44] sm:$0xf]
    %v94 = vld [vmem:[#allocation6 + $0x48] sm:$0xff]
    %v95 = vld [vmem:[#allocation6 + $0x50] sm:$0xf]
    %v96 = vld [vmem:[#allocation6 + $0x54] sm:$0xff]
    %v97 = vld [vmem:[#allocation6 + $0x5c] sm:$0xf]
    %v98 = vld [vmem:[#allocation6 + $0x60] sm:$0xff]
    %v99 = vld [vmem:[#allocation6 + $0x68] sm:$0xf]
    %v100 = vld [vmem:[#allocation6 + $0x6c] sm:$0xff]
    %v101 = vld [vmem:[#allocation6 + $0x74] sm:$0xf]
    %v102 = vld [vmem:[#allocation6 + $0x78] sm:$0xff]
    %v103 = vld [vmem:[#allocation6 + $0x80] sm:$0xf]
    %v104 = vld [vmem:[#allocation6 + $0x84] sm:$0xff]
    %v105 = vld [vmem:[#allocation6 + $0x8c] sm:$0xf]
    %v106 = vld [vmem:[#allocation6 + $0x90] sm:$0xff]
    %v107 = vld [vmem:[#allocation6 + $0x98] sm:$0xf]
    %v108 = vld [vmem:[#allocation6 + $0x9c] sm:$0xff]
    %v109 = vld [vmem:[#allocation6 + $0xa4] sm:$0xf]
    %v110 = vld [vmem:[#allocation6 + $0xa8] sm:$0xff]
    %v111 = vld [vmem:[#allocation6 + $0xb0] sm:$0xf]
    %v112 = vld [vmem:[#allocation6 + $0xb4] sm:$0xff]
    %v113 = vld [vmem:[#allocation6 + $0xbc] sm:$0xf]
    %v114 = vld [vmem:[#allocation8] sm:$0x7]
    %v116 = vlaneseq
    %v117 = vshrl.u32 %v116, 7
    %v118 = vsub.s32 0, %v117
    %v119 = vrot.slane %v114, %v118
    %v120 = vlaneseq
    %v121 = vshrl.u32 %v120, 7
    %v122 = vsub.s32 1, %v121
    %v123 = vrot.slane %v114, %v122
    %v124 = vlaneseq
    %v125 = vshrl.u32 %v124, 7
    %v126 = vsub.s32 2, %v125
    %v127 = vrot.slane %v114, %v126
    %v163 = vunpack.c.l.b16 %v82
    %v164 = vunpack.c.h.b16 %v82
    %v165 = vunpack.c.l.b16 %v83
    %v166 = vunpack.c.l.b16 %v84
    %v167 = vunpack.c.h.b16 %v84
    %v168 = vunpack.c.l.b16 %v85
    %v169 = vunpack.c.l.b16 %v86
    %v170 = vunpack.c.h.b16 %v86
    %v171 = vunpack.c.l.b16 %v87
    %v172 = vunpack.c.l.b16 %v88
    %v173 = vunpack.c.h.b16 %v88
    %v174 = vunpack.c.l.b16 %v89
    %v175 = vunpack.c.l.b16 %v90
    %v176 = vunpack.c.h.b16 %v90
    %v177 = vunpack.c.l.b16 %v91
    %v178 = vunpack.c.l.b16 %v92
    %v179 = vunpack.c.h.b16 %v92
    %v180 = vunpack.c.l.b16 %v93
    %v181 = vunpack.c.l.b16 %v94
    %v182 = vunpack.c.h.b16 %v94
    %v183 = vunpack.c.l.b16 %v95
    %v184 = vunpack.c.l.b16 %v96
    %v185 = vunpack.c.h.b16 %v96
    %v186 = vunpack.c.l.b16 %v97
    %v187 = vunpack.c.l.b16 %v98
    %v188 = vunpack.c.h.b16 %v98
    %v189 = vunpack.c.l.b16 %v99
    %v190 = vunpack.c.l.b16 %v100
    %v191 = vunpack.c.h.b16 %v100
    %v192 = vunpack.c.l.b16 %v101
    %v193 = vunpack.c.l.b16 %v102
    %v194 = vunpack.c.h.b16 %v102
    %v195 = vunpack.c.l.b16 %v103
    %v196 = vunpack.c.l.b16 %v104
    %v197 = vunpack.c.h.b16 %v104
    %v198 = vunpack.c.l.b16 %v105
    %v199 = vunpack.c.l.b16 %v106
    %v200 = vunpack.c.h.b16 %v106
    %v201 = vunpack.c.l.b16 %v107
    %v202 = vunpack.c.l.b16 %v108
    %v203 = vunpack.c.h.b16 %v108
    %v204 = vunpack.c.l.b16 %v109
    %v205 = vunpack.c.l.b16 %v110
    %v206 = vunpack.c.h.b16 %v110
    %v207 = vunpack.c.l.b16 %v111
    %v208 = vunpack.c.l.b16 %v112
    %v209 = vunpack.c.h.b16 %v112
    %v210 = vunpack.c.l.b16 %v113
    %v211 = vpack.c.b16 %v166, %v163
    %v212 = vpack.c.b16 %v167, %v164
    %v213 = vpack.c.b16 %v168, %v165
    %v214 = vpack.c.b16 %v172, %v169
    %v215 = vpack.c.b16 %v173, %v170
    %v216 = vpack.c.b16 %v174, %v171
    %v217 = vpack.c.b16 %v178, %v175
    %v218 = vpack.c.b16 %v179, %v176
    %v219 = vpack.c.b16 %v180, %v177
    %v220 = vpack.c.b16 %v184, %v181
    %v221 = vpack.c.b16 %v185, %v182
    %v222 = vpack.c.b16 %v186, %v183
    %v223 = vpack.c.b16 %v190, %v187
    %v224 = vpack.c.b16 %v191, %v188
    %v225 = vpack.c.b16 %v192, %v189
    %v226 = vpack.c.b16 %v196, %v193
    %v227 = vpack.c.b16 %v197, %v194
    %v228 = vpack.c.b16 %v198, %v195
    %v229 = vpack.c.b16 %v202, %v199
    %v230 = vpack.c.b16 %v203, %v200
    %v231 = vpack.c.b16 %v204, %v201
    %v232 = vpack.c.b16 %v208, %v205
    %v233 = vpack.c.b16 %v209, %v206
    %v234 = vpack.c.b16 %v210, %v207
    %259 = vmatprep.subr.bf16.mxu0 %v233
    %260 = vmatpush1.bf16.msra.mxu0 %v232
    %261 = vmatprep.subr.bf16.mxu0 %v230
    %262 = vmatpush1.bf16.msra.mxu0 %v229
    %263 = vmatprep.subr.bf16.mxu0 %v227
    %264 = vmatpush1.bf16.msra.mxu0 %v226
    %265 = vmatprep.subr.bf16.mxu0 %v224
    %266 = vmatpush1.bf16.msra.mxu0 %v223
    %267 = vmatprep.subr.bf16.mxu0 %v221
    %268 = vmatpush1.bf16.msra.mxu0 %v220
    %269 = vmatprep.subr.bf16.mxu0 %v218
    %270 = vmatpush1.bf16.msra.mxu0 %v217
    %271 = vmatprep.subr.bf16.mxu0 %v215
    %272 = vmatpush1.bf16.msra.mxu0 %v214
    %273 = vmatprep.subr.bf16.mxu0 %v212
    %274 = vmatpush1.bf16.msra.mxu0 %v211
    %275 = vmatprep.subr.bf16.mxu0 0
    %276 = vmatpush2.bf16.msra.mxu0 0
    %277 = vmatprep.subr.bf16.mxu0 0
    %278 = vmatpush2.bf16.msra.mxu0 0
    %279 = vmatprep.subr.bf16.mxu0 0
    %280 = vmatpush2.bf16.msra.mxu0 0
    %281 = vmatprep.subr.bf16.mxu0 0
    %282 = vmatpush2.bf16.msra.mxu0 0
    %283 = vmatprep.subr.bf16.mxu0 0
    %284 = vmatpush2.bf16.msra.mxu0 0
    %285 = vmatprep.subr.bf16.mxu0 0
    %286 = vmatpush2.bf16.msra.mxu0 0
    %287 = vmatprep.subr.bf16.mxu0 0
    %288 = vmatpush2.bf16.msra.mxu0 0
    %289 = vmatprep.subr.bf16.mxu0 0
    %290 = vmatpush2.bf16.msra.mxu0 0
    %291 = vmatprep.mubr.bf16.mxu0 0
    %292 = vmatmul.mubr.bf16.gmra.mxu0 %v81
    %v293 = vpop.f32.mrf.mxu0
    %v294 = vadd.f32 %v119, %v293
    %v295 = vpop.f32.mrf.mxu0
    %v296 = vadd.f32 %v123, %v295
    %v297 = vpop.f32.mrf.mxu0
    %v298 = vpop.f32.mrf.mxu0
    %299 = vdwg.mxu0
    %300 = vmatprep.subr.bf16.mxu0 0
    %301 = vmatpush1.bf16.msra.mxu0 %v234
    %302 = vmatprep.subr.bf16.mxu0 0
    %303 = vmatpush1.bf16.msra.mxu0 %v231
    %304 = vmatprep.subr.bf16.mxu0 0
    %305 = vmatpush1.bf16.msra.mxu0 %v228
    %306 = vmatprep.subr.bf16.mxu0 0
    %307 = vmatpush1.bf16.msra.mxu0 %v225
    %308 = vmatprep.subr.bf16.mxu0 0
    %309 = vmatpush1.bf16.msra.mxu0 %v222
    %310 = vmatprep.subr.bf16.mxu0 0
    %311 = vmatpush1.bf16.msra.mxu0 %v219
    %312 = vmatprep.subr.bf16.mxu0 0
    %313 = vmatpush1.bf16.msra.mxu0 %v216
    %314 = vmatprep.subr.bf16.mxu0 0
    %315 = vmatpush1.bf16.msra.mxu0 %v213
    %316 = vmatprep.subr.bf16.mxu0 0
    %317 = vmatpush2.bf16.msra.mxu0 0
    %318 = vmatprep.subr.bf16.mxu0 0
    %319 = vmatpush2.bf16.msra.mxu0 0
    %320 = vmatprep.subr.bf16.mxu0 0
    %321 = vmatpush2.bf16.msra.mxu0 0
    %322 = vmatprep.subr.bf16.mxu0 0
    %323 = vmatpush2.bf16.msra.mxu0 0
    %324 = vmatprep.subr.bf16.mxu0 0
    %325 = vmatpush2.bf16.msra.mxu0 0
    %326 = vmatprep.subr.bf16.mxu0 0
    %327 = vmatpush2.bf16.msra.mxu0 0
    %328 = vmatprep.subr.bf16.mxu0 0
    %329 = vmatpush2.bf16.msra.mxu0 0
    %330 = vmatprep.subr.bf16.mxu0 0
    %331 = vmatpush2.bf16.msra.mxu0 0
    %332 = vmatprep.mubr.bf16.mxu0 0
    %333 = vmatmul.mubr.bf16.gmra.mxu0 %v81
    %v334 = vpop.f32.mrf.mxu0
    %v335 = vadd.f32 %v127, %v334
    %v336 = vpop.f32.mrf.mxu0
    %v337 = vpop.f32.mrf.mxu0
    %v338 = vpop.f32.mrf.mxu0
    %339 = vdwg.mxu0
    %v340 = vld [vmem:[%s5] sm:$0xff]
    %v341 = vpack.c.bf16 %v294, %v294
    %v342 = vpack.c.bf16 %v296, %v296
    %v343 = vpack.c.bf16 %v335, %v335
    %vm344 = vcmask 261120
    %v346 = vsel %vm344, %v341, 0
    %v349 = vsel %vm344, %v342, 0
    %351 = vmatprep.subr.bf16.mxu0 0
    %352 = vmatpush1.bf16.xpose.msra.mxu0 0
    %353 = vmatprep.subr.bf16.mxu0 0
    %354 = vmatpush1.bf16.xpose.msra.mxu0 0
    %355 = vmatprep.subr.bf16.mxu0 0
    %356 = vmatpush1.bf16.xpose.msra.mxu0 0
    %357 = vmatprep.subr.bf16.mxu0 0
    %358 = vmatpush1.bf16.xpose.msra.mxu0 0
    %359 = vmatprep.subr.bf16.mxu0 0
    %360 = vmatpush1.bf16.xpose.msra.mxu0 0
    %361 = vmatprep.subr.bf16.mxu0 0
    %362 = vmatpush1.bf16.xpose.msra.mxu0 0
    %363 = vmatprep.subr.bf16.mxu0 0
    %364 = vmatpush1.bf16.xpose.msra.mxu0 0
    %365 = vmatprep.subr.bf16.mxu0 0
    %366 = vmatpush1.bf16.xpose.msra.mxu0 %v349
    %367 = vmatprep.subr.bf16.mxu0 0
    %368 = vmatpush2.bf16.xpose.msra.mxu0 0
    %369 = vmatprep.subr.bf16.mxu0 0
    %370 = vmatpush2.bf16.xpose.msra.mxu0 0
    %371 = vmatprep.subr.bf16.mxu0 0
    %372 = vmatpush2.bf16.xpose.msra.mxu0 0
    %373 = vmatprep.subr.bf16.mxu0 0
    %374 = vmatpush2.bf16.xpose.msra.mxu0 0
    %375 = vmatprep.subr.bf16.mxu0 0
    %376 = vmatpush2.bf16.xpose.msra.mxu0 0
    %377 = vmatprep.subr.bf16.mxu0 0
    %378 = vmatpush2.bf16.xpose.msra.mxu0 0
    %379 = vmatprep.subr.bf16.mxu0 0
    %380 = vmatpush2.bf16.xpose.msra.mxu0 0
    %381 = vmatprep.subr.bf16.mxu0 0
    %382 = vmatpush2.bf16.xpose.msra.mxu0 0
    %383 = vmatprep.mubr.bf16.mxu0 0
    %384 = vmatmul.mubr.bf16.gmra.mxu0 %v346
    %v385 = vpop.f32.mrf.mxu0
    %v386 = vadd.f32 %v340, %v385
    %v387 = vpop.f32.mrf.mxu0
    %v388 = vpop.f32.mrf.mxu0
    %v389 = vpop.f32.mrf.mxu0
    %390 = vdwg.mxu0
    %vm391 = vcmask 64512
    %v392 = vsel %vm391, %v386, -inf
    %393 = vmax.xlane.f32.xlu0 %v392
    %v394 = vpop.xlane.xlu0 %393
    %v395 = vsub.f32 %v386, %v394
    %v396 = vmul.f32 %v395, 1.442695
    %v397 = vpow.pop %v396
    %v398 = vpack.c.bf16 %v397, %v397
    %v400 = vsel %vm391, %v398, 0
    %vm402 = vcmask 1043456
    %v404 = vsel %vm402, %v343, 0
    %406 = vmatprep.subr.bf16.mxu0 0
    %407 = vmatpush1.bf16.msra.mxu0 0
    %408 = vmatprep.subr.bf16.mxu0 0
    %409 = vmatpush1.bf16.msra.mxu0 0
    %410 = vmatprep.subr.bf16.mxu0 0
    %411 = vmatpush1.bf16.msra.mxu0 0
    %412 = vmatprep.subr.bf16.mxu0 0
    %413 = vmatpush1.bf16.msra.mxu0 0
    %414 = vmatprep.subr.bf16.mxu0 0
    %415 = vmatpush1.bf16.msra.mxu0 0
    %416 = vmatprep.subr.bf16.mxu0 0
    %417 = vmatpush1.bf16.msra.mxu0 0
    %418 = vmatprep.subr.bf16.mxu0 0
    %419 = vmatpush1.bf16.msra.mxu0 0
    %420 = vmatprep.subr.bf16.mxu0 0
    %421 = vmatpush1.bf16.msra.mxu0 %v404
    %422 = vmatprep.subr.bf16.mxu0 0
    %423 = vmatpush2.bf16.msra.mxu0 0
    %424 = vmatprep.subr.bf16.mxu0 0
    %425 = vmatpush2.bf16.msra.mxu0 0
    %426 = vmatprep.subr.bf16.mxu0 0
    %427 = vmatpush2.bf16.msra.mxu0 0
    %428 = vmatprep.subr.bf16.mxu0 0
    %429 = vmatpush2.bf16.msra.mxu0 0
    %430 = vmatprep.subr.bf16.mxu0 0
    %431 = vmatpush2.bf16.msra.mxu0 0
    %432 = vmatprep.subr.bf16.mxu0 0
    %433 = vmatpush2.bf16.msra.mxu0 0
    %434 = vmatprep.subr.bf16.mxu0 0
    %435 = vmatpush2.bf16.msra.mxu0 0
    %436 = vmatprep.subr.bf16.mxu0 0
    %437 = vmatpush2.bf16.msra.mxu0 0
    %438 = vmatprep.mubr.bf16.mxu0 0
    %439 = vmatmul.mubr.bf16.gmra.mxu0 %v400
    %v440 = vpop.f32.mrf.mxu0
    %v441 = vadd.f32 0.0, %v440
    %v442 = vpop.f32.mrf.mxu0
    %v443 = vpop.f32.mrf.mxu0
    %v444 = vpop.f32.mrf.mxu0
    %445 = vdwg.mxu0
    %v447 = vsel %vm402, 1065369472, 0
    %449 = vmatprep.subr.bf16.mxu0 0
    %450 = vmatpush1.bf16.msra.mxu0 0
    %451 = vmatprep.subr.bf16.mxu0 0
    %452 = vmatpush1.bf16.msra.mxu0 0
    %453 = vmatprep.subr.bf16.mxu0 0
    %454 = vmatpush1.bf16.msra.mxu0 0
    %455 = vmatprep.subr.bf16.mxu0 0
    %456 = vmatpush1.bf16.msra.mxu0 0
    %457 = vmatprep.subr.bf16.mxu0 0
    %458 = vmatpush1.bf16.msra.mxu0 0
    %459 = vmatprep.subr.bf16.mxu0 0
    %460 = vmatpush1.bf16.msra.mxu0 0
    %461 = vmatprep.subr.bf16.mxu0 0
    %462 = vmatpush1.bf16.msra.mxu0 0
    %463 = vmatprep.subr.bf16.mxu0 0
    %464 = vmatpush1.bf16.msra.mxu0 %v447
    %465 = vmatprep.subr.bf16.mxu0 0
    %466 = vmatpush2.bf16.msra.mxu0 0
    %467 = vmatprep.subr.bf16.mxu0 0
    %468 = vmatpush2.bf16.msra.mxu0 0
    %469 = vmatprep.subr.bf16.mxu0 0
    %470 = vmatpush2.bf16.msra.mxu0 0
    %471 = vmatprep.subr.bf16.mxu0 0
    %472 = vmatpush2.bf16.msra.mxu0 0
    %473 = vmatprep.subr.bf16.mxu0 0
    %474 = vmatpush2.bf16.msra.mxu0 0
    %475 = vmatprep.subr.bf16.mxu0 0
    %476 = vmatpush2.bf16.msra.mxu0 0
    %477 = vmatprep.subr.bf16.mxu0 0
    %478 = vmatpush2.bf16.msra.mxu0 0
    %479 = vmatprep.subr.bf16.mxu0 0
    %480 = vmatpush2.bf16.msra.mxu0 0
    %481 = vmatprep.mubr.bf16.mxu0 0
    %482 = vmatmul.mubr.bf16.gmra.mxu0 %v400
    %v483 = vpop.f32.mrf.mxu0
    %v484 = vadd.f32 0.0, %v483
    %v485 = vpop.f32.mrf.mxu0
    %v486 = vpop.f32.mrf.mxu0
    %v487 = vpop.f32.mrf.mxu0
    %488 = vdwg.mxu0
    %v489 = vrcp.pop %v484
    %491 = vset.pattern.permute.xlu0 0
    %492 = vperm.xlu0 %491, %v489
    %v493 = vpop.permute.xlu0 %492
    %v495 = vmul.f32 %v441, %v493
    %v496 = vpack.c.bf16 %v495, %v495
    %vm497 = vcmask 257024
    %498 = vst.msk [vmem:[#allocation2] sm:$0xf] %vm497, %v496
    %500 = vrot.lane.b32.xlu0 %v341, 96
    %v501 = vpop.permute.xlu0 %500
    %503 = vrot.lane.b32.xlu0 %v342, 96
    %v504 = vpop.permute.xlu0 %503
    %v506 = vsel %vm344, %v501, 0
    %v509 = vsel %vm344, %v504, 0
    %511 = vmatprep.subr.bf16.mxu0 0
    %512 = vmatpush1.bf16.xpose.msra.mxu0 0
    %513 = vmatprep.subr.bf16.mxu0 0
    %514 = vmatpush1.bf16.xpose.msra.mxu0 0
    %515 = vmatprep.subr.bf16.mxu0 0
    %516 = vmatpush1.bf16.xpose.msra.mxu0 0
    %517 = vmatprep.subr.bf16.mxu0 0
    %518 = vmatpush1.bf16.xpose.msra.mxu0 0
    %519 = vmatprep.subr.bf16.mxu0 0
    %520 = vmatpush1.bf16.xpose.msra.mxu0 0
    %521 = vmatprep.subr.bf16.mxu0 0
    %522 = vmatpush1.bf16.xpose.msra.mxu0 0
    %523 = vmatprep.subr.bf16.mxu0 0
    %524 = vmatpush1.bf16.xpose.msra.mxu0 0
    %525 = vmatprep.subr.bf16.mxu0 0
    %526 = vmatpush1.bf16.xpose.msra.mxu0 %v509
    %527 = vmatprep.subr.bf16.mxu0 0
    %528 = vmatpush2.bf16.xpose.msra.mxu0 0
    %529 = vmatprep.subr.bf16.mxu0 0
    %530 = vmatpush2.bf16.xpose.msra.mxu0 0
    %531 = vmatprep.subr.bf16.mxu0 0
    %532 = vmatpush2.bf16.xpose.msra.mxu0 0
    %533 = vmatprep.subr.bf16.mxu0 0
    %534 = vmatpush2.bf16.xpose.msra.mxu0 0
    %535 = vmatprep.subr.bf16.mxu0 0
    %536 = vmatpush2.bf16.xpose.msra.mxu0 0
    %537 = vmatprep.subr.bf16.mxu0 0
    %538 = vmatpush2.bf16.xpose.msra.mxu0 0
    %539 = vmatprep.subr.bf16.mxu0 0
    %540 = vmatpush2.bf16.xpose.msra.mxu0 0
    %541 = vmatprep.subr.bf16.mxu0 0
    %542 = vmatpush2.bf16.xpose.msra.mxu0 0
    %543 = vmatprep.mubr.bf16.mxu0 0
    %544 = vmatmul.mubr.bf16.gmra.mxu0 %v506
    %v545 = vpop.f32.mrf.mxu0
    %v546 = vadd.f32 %v340, %v545
    %v547 = vpop.f32.mrf.mxu0
    %v548 = vpop.f32.mrf.mxu0
    %v549 = vpop.f32.mrf.mxu0
    %550 = vdwg.mxu0
    %v551 = vsel %vm391, %v546, -inf
    %552 = vmax.xlane.f32.xlu0 %v551
    %v553 = vpop.xlane.xlu0 %552
    %v554 = vsub.f32 %v546, %v553
    %v555 = vmul.f32 %v554, 1.442695
    %v556 = vpow.pop %v555
    %v557 = vpack.c.bf16 %v556, %v556
    %559 = vrot.lane.b32.xlu0 %v343, 96
    %v560 = vpop.permute.xlu0 %559
    %v562 = vsel %vm391, %v557, 0
    %v565 = vsel %vm402, %v560, 0
    %567 = vmatprep.subr.bf16.mxu0 0
    %568 = vmatpush1.bf16.msra.mxu0 0
    %569 = vmatprep.subr.bf16.mxu0 0
    %570 = vmatpush1.bf16.msra.mxu0 0
    %571 = vmatprep.subr.bf16.mxu0 0
    %572 = vmatpush1.bf16.msra.mxu0 0
    %573 = vmatprep.subr.bf16.mxu0 0
    %574 = vmatpush1.bf16.msra.mxu0 0
    %575 = vmatprep.subr.bf16.mxu0 0
    %576 = vmatpush1.bf16.msra.mxu0 0
    %577 = vmatprep.subr.bf16.mxu0 0
    %578 = vmatpush1.bf16.msra.mxu0 0
    %579 = vmatprep.subr.bf16.mxu0 0
    %580 = vmatpush1.bf16.msra.mxu0 0
    %581 = vmatprep.subr.bf16.mxu0 0
    %582 = vmatpush1.bf16.msra.mxu0 %v565
    %583 = vmatprep.subr.bf16.mxu0 0
    %584 = vmatpush2.bf16.msra.mxu0 0
    %585 = vmatprep.subr.bf16.mxu0 0
    %586 = vmatpush2.bf16.msra.mxu0 0
    %587 = vmatprep.subr.bf16.mxu0 0
    %588 = vmatpush2.bf16.msra.mxu0 0
    %589 = vmatprep.subr.bf16.mxu0 0
    %590 = vmatpush2.bf16.msra.mxu0 0
    %591 = vmatprep.subr.bf16.mxu0 0
    %592 = vmatpush2.bf16.msra.mxu0 0
    %593 = vmatprep.subr.bf16.mxu0 0
    %594 = vmatpush2.bf16.msra.mxu0 0
    %595 = vmatprep.subr.bf16.mxu0 0
    %596 = vmatpush2.bf16.msra.mxu0 0
    %597 = vmatprep.subr.bf16.mxu0 0
    %598 = vmatpush2.bf16.msra.mxu0 0
    %599 = vmatprep.mubr.bf16.mxu0 0
    %600 = vmatmul.mubr.bf16.gmra.mxu0 %v562
    %v601 = vpop.f32.mrf.mxu0
    %v602 = vadd.f32 0.0, %v601
    %v603 = vpop.f32.mrf.mxu0
    %v604 = vpop.f32.mrf.mxu0
    %v605 = vpop.f32.mrf.mxu0
    %606 = vdwg.mxu0
    %607 = vmatprep.subr.bf16.mxu0 0
    %608 = vmatpush1.bf16.msra.mxu0 0
    %609 = vmatprep.subr.bf16.mxu0 0
    %610 = vmatpush1.bf16.msra.mxu0 0
    %611 = vmatprep.subr.bf16.mxu0 0
    %612 = vmatpush1.bf16.msra.mxu0 0
    %613 = vmatprep.subr.bf16.mxu0 0
    %614 = vmatpush1.bf16.msra.mxu0 0
    %615 = vmatprep.subr.bf16.mxu0 0
    %616 = vmatpush1.bf16.msra.mxu0 0
    %617 = vmatprep.subr.bf16.mxu0 0
    %618 = vmatpush1.bf16.msra.mxu0 0
    %619 = vmatprep.subr.bf16.mxu0 0
    %620 = vmatpush1.bf16.msra.mxu0 0
    %621 = vmatprep.subr.bf16.mxu0 0
    %622 = vmatpush1.bf16.msra.mxu0 %v447
    %623 = vmatprep.subr.bf16.mxu0 0
    %624 = vmatpush2.bf16.msra.mxu0 0
    %625 = vmatprep.subr.bf16.mxu0 0
    %626 = vmatpush2.bf16.msra.mxu0 0
    %627 = vmatprep.subr.bf16.mxu0 0
    %628 = vmatpush2.bf16.msra.mxu0 0
    %629 = vmatprep.subr.bf16.mxu0 0
    %630 = vmatpush2.bf16.msra.mxu0 0
    %631 = vmatprep.subr.bf16.mxu0 0
    %632 = vmatpush2.bf16.msra.mxu0 0
    %633 = vmatprep.subr.bf16.mxu0 0
    %634 = vmatpush2.bf16.msra.mxu0 0
    %635 = vmatprep.subr.bf16.mxu0 0
    %636 = vmatpush2.bf16.msra.mxu0 0
    %637 = vmatprep.subr.bf16.mxu0 0
    %638 = vmatpush2.bf16.msra.mxu0 0
    %639 = vmatprep.mubr.bf16.mxu0 0
    %640 = vmatmul.mubr.bf16.gmra.mxu0 %v562
    %v641 = vpop.f32.mrf.mxu0
    %v642 = vadd.f32 0.0, %v641
    %v643 = vpop.f32.mrf.mxu0
    %v644 = vpop.f32.mrf.mxu0
    %v645 = vpop.f32.mrf.mxu0
    %646 = vdwg.mxu0
    %v647 = vrcp.pop %v642
    %649 = vset.pattern.permute.xlu0 0
    %650 = vperm.xlu0 %649, %v647
    %v651 = vpop.permute.xlu0 %650
    %v653 = vmul.f32 %v602, %v651
    %v654 = vpack.c.bf16 %v653, %v653
    %v656 = vunpack.c.l.b16 %v654
    %v657 = vpack.c.b16 %v656, %v656
    %658 = vrot.lane.b32.xlu0 %v657, 32
    %v659 = vpop.permute.xlu0 %658
    %vm661 = vcmask 519424
    %662 = vst.msk [vmem:[#allocation2] sm:$0xf] %vm661, %v659
    %663 = vrot.lane.b32.xlu0 %v341, 64
    %v664 = vpop.permute.xlu0 %663
    %665 = vrot.lane.b32.xlu0 %v342, 64
    %v666 = vpop.permute.xlu0 %665
    %v668 = vsel %vm344, %v664, 0
    %v671 = vsel %vm344, %v666, 0
    %673 = vmatprep.subr.bf16.mxu0 0
    %674 = vmatpush1.bf16.xpose.msra.mxu0 0
    %675 = vmatprep.subr.bf16.mxu0 0
    %676 = vmatpush1.bf16.xpose.msra.mxu0 0
    %677 = vmatprep.subr.bf16.mxu0 0
    %678 = vmatpush1.bf16.xpose.msra.mxu0 0
    %679 = vmatprep.subr.bf16.mxu0 0
    %680 = vmatpush1.bf16.xpose.msra.mxu0 0
    %681 = vmatprep.subr.bf16.mxu0 0
    %682 = vmatpush1.bf16.xpose.msra.mxu0 0
    %683 = vmatprep.subr.bf16.mxu0 0
    %684 = vmatpush1.bf16.xpose.msra.mxu0 0
    %685 = vmatprep.subr.bf16.mxu0 0
    %686 = vmatpush1.bf16.xpose.msra.mxu0 0
    %687 = vmatprep.subr.bf16.mxu0 0
    %688 = vmatpush1.bf16.xpose.msra.mxu0 %v671
    %689 = vmatprep.subr.bf16.mxu0 0
    %690 = vmatpush2.bf16.xpose.msra.mxu0 0
    %691 = vmatprep.subr.bf16.mxu0 0
    %692 = vmatpush2.bf16.xpose.msra.mxu0 0
    %693 = vmatprep.subr.bf16.mxu0 0
    %694 = vmatpush2.bf16.xpose.msra.mxu0 0
    %695 = vmatprep.subr.bf16.mxu0 0
    %696 = vmatpush2.bf16.xpose.msra.mxu0 0
    %697 = vmatprep.subr.bf16.mxu0 0
    %698 = vmatpush2.bf16.xpose.msra.mxu0 0
    %699 = vmatprep.subr.bf16.mxu0 0
    %700 = vmatpush2.bf16.xpose.msra.mxu0 0
    %701 = vmatprep.subr.bf16.mxu0 0
    %702 = vmatpush2.bf16.xpose.msra.mxu0 0
    %703 = vmatprep.subr.bf16.mxu0 0
    %704 = vmatpush2.bf16.xpose.msra.mxu0 0
    %705 = vmatprep.mubr.bf16.mxu0 0
    %706 = vmatmul.mubr.bf16.gmra.mxu0 %v668
    %v707 = vpop.f32.mrf.mxu0
    %v708 = vadd.f32 %v340, %v707
    %v709 = vpop.f32.mrf.mxu0
    %v710 = vpop.f32.mrf.mxu0
    %v711 = vpop.f32.mrf.mxu0
    %712 = vdwg.mxu0
    %v713 = vsel %vm391, %v708, -inf
    %714 = vmax.xlane.f32.xlu0 %v713
    %v715 = vpop.xlane.xlu0 %714
    %v716 = vsub.f32 %v708, %v715
    %v717 = vmul.f32 %v716, 1.442695
    %v718 = vpow.pop %v717
    %v719 = vpack.c.bf16 %v718, %v718
    %720 = vrot.lane.b32.xlu0 %v343, 64
    %v721 = vpop.permute.xlu0 %720
    %v723 = vsel %vm391, %v719, 0
    %v726 = vsel %vm402, %v721, 0
    %728 = vmatprep.subr.bf16.mxu0 0
    %729 = vmatpush1.bf16.msra.mxu0 0
    %730 = vmatprep.subr.bf16.mxu0 0
    %731 = vmatpush1.bf16.msra.mxu0 0
    %732 = vmatprep.subr.bf16.mxu0 0
    %733 = vmatpush1.bf16.msra.mxu0 0
    %734 = vmatprep.subr.bf16.mxu0 0
    %735 = vmatpush1.bf16.msra.mxu0 0
    %736 = vmatprep.subr.bf16.mxu0 0
    %737 = vmatpush1.bf16.msra.mxu0 0
    %738 = vmatprep.subr.bf16.mxu0 0
    %739 = vmatpush1.bf16.msra.mxu0 0
    %740 = vmatprep.subr.bf16.mxu0 0
    %741 = vmatpush1.bf16.msra.mxu0 0
    %742 = vmatprep.subr.bf16.mxu0 0
    %743 = vmatpush1.bf16.msra.mxu0 %v726
    %744 = vmatprep.subr.bf16.mxu0 0
    %745 = vmatpush2.bf16.msra.mxu0 0
    %746 = vmatprep.subr.bf16.mxu0 0
    %747 = vmatpush2.bf16.msra.mxu0 0
    %748 = vmatprep.subr.bf16.mxu0 0
    %749 = vmatpush2.bf16.msra.mxu0 0
    %750 = vmatprep.subr.bf16.mxu0 0
    %751 = vmatpush2.bf16.msra.mxu0 0
    %752 = vmatprep.subr.bf16.mxu0 0
    %753 = vmatpush2.bf16.msra.mxu0 0
    %754 = vmatprep.subr.bf16.mxu0 0
    %755 = vmatpush2.bf16.msra.mxu0 0
    %756 = vmatprep.subr.bf16.mxu0 0
    %757 = vmatpush2.bf16.msra.mxu0 0
    %758 = vmatprep.subr.bf16.mxu0 0
    %759 = vmatpush2.bf16.msra.mxu0 0
    %760 = vmatprep.mubr.bf16.mxu0 0
    %761 = vmatmul.mubr.bf16.gmra.mxu0 %v723
    %v762 = vpop.f32.mrf.mxu0
    %v763 = vadd.f32 0.0, %v762
    %v764 = vpop.f32.mrf.mxu0
    %v765 = vpop.f32.mrf.mxu0
    %v766 = vpop.f32.mrf.mxu0
    %767 = vdwg.mxu0
    %768 = vmatprep.subr.bf16.mxu0 0
    %769 = vmatpush1.bf16.msra.mxu0 0
    %770 = vmatprep.subr.bf16.mxu0 0
    %771 = vmatpush1.bf16.msra.mxu0 0
    %772 = vmatprep.subr.bf16.mxu0 0
    %773 = vmatpush1.bf16.msra.mxu0 0
    %774 = vmatprep.subr.bf16.mxu0 0
    %775 = vmatpush1.bf16.msra.mxu0 0
    %776 = vmatprep.subr.bf16.mxu0 0
    %777 = vmatpush1.bf16.msra.mxu0 0
    %778 = vmatprep.subr.bf16.mxu0 0
    %779 = vmatpush1.bf16.msra.mxu0 0
    %780 = vmatprep.subr.bf16.mxu0 0
    %781 = vmatpush1.bf16.msra.mxu0 0
    %782 = vmatprep.subr.bf16.mxu0 0
    %783 = vmatpush1.bf16.msra.mxu0 %v447
    %784 = vmatprep.subr.bf16.mxu0 0
    %785 = vmatpush2.bf16.msra.mxu0 0
    %786 = vmatprep.subr.bf16.mxu0 0
    %787 = vmatpush2.bf16.msra.mxu0 0
    %788 = vmatprep.subr.bf16.mxu0 0
    %789 = vmatpush2.bf16.msra.mxu0 0
    %790 = vmatprep.subr.bf16.mxu0 0
    %791 = vmatpush2.bf16.msra.mxu0 0
    %792 = vmatprep.subr.bf16.mxu0 0
    %793 = vmatpush2.bf16.msra.mxu0 0
    %794 = vmatprep.subr.bf16.mxu0 0
    %795 = vmatpush2.bf16.msra.mxu0 0
    %796 = vmatprep.subr.bf16.mxu0 0
    %797 = vmatpush2.bf16.msra.mxu0 0
    %798 = vmatprep.subr.bf16.mxu0 0
    %799 = vmatpush2.bf16.msra.mxu0 0
    %800 = vmatprep.mubr.bf16.mxu0 0
    %801 = vmatmul.mubr.bf16.gmra.mxu0 %v723
    %v802 = vpop.f32.mrf.mxu0
    %v803 = vadd.f32 0.0, %v802
    %v804 = vpop.f32.mrf.mxu0
    %v805 = vpop.f32.mrf.mxu0
    %v806 = vpop.f32.mrf.mxu0
    %807 = vdwg.mxu0
    %v808 = vrcp.pop %v803
    %810 = vset.pattern.permute.xlu0 0
    %811 = vperm.xlu0 %810, %v808
    %v812 = vpop.permute.xlu0 %811
    %v814 = vmul.f32 %v763, %v812
    %v815 = vpack.c.bf16 %v814, %v814
    %v817 = vunpack.c.l.b16 %v815
    %v818 = vpack.c.b16 %v817, %v817
    %819 = vrot.lane.b32.xlu0 %v818, 64
    %v820 = vpop.permute.xlu0 %819
    %vm822 = vcmask 781824
    %823 = vst.msk [vmem:[#allocation2] sm:$0xf] %vm822, %v820
    %824 = vrot.lane.b32.xlu0 %v341, 32
    %v825 = vpop.permute.xlu0 %824
    %826 = vrot.lane.b32.xlu0 %v342, 32
    %v827 = vpop.permute.xlu0 %826
    %v829 = vsel %vm344, %v825, 0
    %v832 = vsel %vm344, %v827, 0
    %834 = vmatprep.subr.bf16.mxu0 0
    %835 = vmatpush1.bf16.xpose.msra.mxu0 0
    %836 = vmatprep.subr.bf16.mxu0 0
    %837 = vmatpush1.bf16.xpose.msra.mxu0 0
    %838 = vmatprep.subr.bf16.mxu0 0
    %839 = vmatpush1.bf16.xpose.msra.mxu0 0
    %840 = vmatprep.subr.bf16.mxu0 0
    %841 = vmatpush1.bf16.xpose.msra.mxu0 0
    %842 = vmatprep.subr.bf16.mxu0 0
    %843 = vmatpush1.bf16.xpose.msra.mxu0 0
    %844 = vmatprep.subr.bf16.mxu0 0
    %845 = vmatpush1.bf16.xpose.msra.mxu0 0
    %846 = vmatprep.subr.bf16.mxu0 0
    %847 = vmatpush1.bf16.xpose.msra.mxu0 0
    %848 = vmatprep.subr.bf16.mxu0 0
    %849 = vmatpush1.bf16.xpose.msra.mxu0 %v832
    %850 = vmatprep.subr.bf16.mxu0 0
    %851 = vmatpush2.bf16.xpose.msra.mxu0 0
    %852 = vmatprep.subr.bf16.mxu0 0
    %853 = vmatpush2.bf16.xpose.msra.mxu0 0
    %854 = vmatprep.subr.bf16.mxu0 0
    %855 = vmatpush2.bf16.xpose.msra.mxu0 0
    %856 = vmatprep.subr.bf16.mxu0 0
    %857 = vmatpush2.bf16.xpose.msra.mxu0 0
    %858 = vmatprep.subr.bf16.mxu0 0
    %859 = vmatpush2.bf16.xpose.msra.mxu0 0
    %860 = vmatprep.subr.bf16.mxu0 0
    %861 = vmatpush2.bf16.xpose.msra.mxu0 0
    %862 = vmatprep.subr.bf16.mxu0 0
    %863 = vmatpush2.bf16.xpose.msra.mxu0 0
    %864 = vmatprep.subr.bf16.mxu0 0
    %865 = vmatpush2.bf16.xpose.msra.mxu0 0
    %866 = vmatprep.mubr.bf16.mxu0 0
    %867 = vmatmul.mubr.bf16.gmra.mxu0 %v829
    %v868 = vpop.f32.mrf.mxu0
    %v869 = vadd.f32 %v340, %v868
    %v870 = vpop.f32.mrf.mxu0
    %v871 = vpop.f32.mrf.mxu0
    %v872 = vpop.f32.mrf.mxu0
    %873 = vdwg.mxu0
    %v874 = vsel %vm391, %v869, -inf
    %875 = vmax.xlane.f32.xlu0 %v874
    %v876 = vpop.xlane.xlu0 %875
    %v877 = vsub.f32 %v869, %v876
    %v878 = vmul.f32 %v877, 1.442695
    %v879 = vpow.pop %v878
    %v880 = vpack.c.bf16 %v879, %v879
    %881 = vrot.lane.b32.xlu0 %v343, 32
    %v882 = vpop.permute.xlu0 %881
    %v884 = vsel %vm391, %v880, 0
    %v887 = vsel %vm402, %v882, 0
    %889 = vmatprep.subr.bf16.mxu0 0
    %890 = vmatpush1.bf16.msra.mxu0 0
    %891 = vmatprep.subr.bf16.mxu0 0
    %892 = vmatpush1.bf16.msra.mxu0 0
    %893 = vmatprep.subr.bf16.mxu0 0
    %894 = vmatpush1.bf16.msra.mxu0 0
    %895 = vmatprep.subr.bf16.mxu0 0
    %896 = vmatpush1.bf16.msra.mxu0 0
    %897 = vmatprep.subr.bf16.mxu0 0
    %898 = vmatpush1.bf16.msra.mxu0 0
    %899 = vmatprep.subr.bf16.mxu0 0
    %900 = vmatpush1.bf16.msra.mxu0 0
    %901 = vmatprep.subr.bf16.mxu0 0
    %902 = vmatpush1.bf16.msra.mxu0 0
    %903 = vmatprep.subr.bf16.mxu0 0
    %904 = vmatpush1.bf16.msra.mxu0 %v887
    %905 = vmatprep.subr.bf16.mxu0 0
    %906 = vmatpush2.bf16.msra.mxu0 0
    %907 = vmatprep.subr.bf16.mxu0 0
    %908 = vmatpush2.bf16.msra.mxu0 0
    %909 = vmatprep.subr.bf16.mxu0 0
    %910 = vmatpush2.bf16.msra.mxu0 0
    %911 = vmatprep.subr.bf16.mxu0 0
    %912 = vmatpush2.bf16.msra.mxu0 0
    %913 = vmatprep.subr.bf16.mxu0 0
    %914 = vmatpush2.bf16.msra.mxu0 0
    %915 = vmatprep.subr.bf16.mxu0 0
    %916 = vmatpush2.bf16.msra.mxu0 0
    %917 = vmatprep.subr.bf16.mxu0 0
    %918 = vmatpush2.bf16.msra.mxu0 0
    %919 = vmatprep.subr.bf16.mxu0 0
    %920 = vmatpush2.bf16.msra.mxu0 0
    %921 = vmatprep.mubr.bf16.mxu0 0
    %922 = vmatmul.mubr.bf16.gmra.mxu0 %v884
    %v923 = vpop.f32.mrf.mxu0
    %v924 = vadd.f32 0.0, %v923
    %v925 = vpop.f32.mrf.mxu0
    %v926 = vpop.f32.mrf.mxu0
    %v927 = vpop.f32.mrf.mxu0
    %928 = vdwg.mxu0
    %929 = vmatprep.subr.bf16.mxu0 0
    %930 = vmatpush1.bf16.msra.mxu0 0
    %931 = vmatprep.subr.bf16.mxu0 0
    %932 = vmatpush1.bf16.msra.mxu0 0
    %933 = vmatprep.subr.bf16.mxu0 0
    %934 = vmatpush1.bf16.msra.mxu0 0
    %935 = vmatprep.subr.bf16.mxu0 0
    %936 = vmatpush1.bf16.msra.mxu0 0
    %937 = vmatprep.subr.bf16.mxu0 0
    %938 = vmatpush1.bf16.msra.mxu0 0
    %939 = vmatprep.subr.bf16.mxu0 0
    %940 = vmatpush1.bf16.msra.mxu0 0
    %941 = vmatprep.subr.bf16.mxu0 0
    %942 = vmatpush1.bf16.msra.mxu0 0
    %943 = vmatprep.subr.bf16.mxu0 0
    %944 = vmatpush1.bf16.msra.mxu0 %v447
    %945 = vmatprep.subr.bf16.mxu0 0
    %946 = vmatpush2.bf16.msra.mxu0 0
    %947 = vmatprep.subr.bf16.mxu0 0
    %948 = vmatpush2.bf16.msra.mxu0 0
    %949 = vmatprep.subr.bf16.mxu0 0
    %950 = vmatpush2.bf16.msra.mxu0 0
    %951 = vmatprep.subr.bf16.mxu0 0
    %952 = vmatpush2.bf16.msra.mxu0 0
    %953 = vmatprep.subr.bf16.mxu0 0
    %954 = vmatpush2.bf16.msra.mxu0 0
    %955 = vmatprep.subr.bf16.mxu0 0
    %956 = vmatpush2.bf16.msra.mxu0 0
    %957 = vmatprep.subr.bf16.mxu0 0
    %958 = vmatpush2.bf16.msra.mxu0 0
    %959 = vmatprep.subr.bf16.mxu0 0
    %960 = vmatpush2.bf16.msra.mxu0 0
    %961 = vmatprep.mubr.bf16.mxu0 0
    %962 = vmatmul.mubr.bf16.gmra.mxu0 %v884
    %v963 = vpop.f32.mrf.mxu0
    %v964 = vadd.f32 0.0, %v963
    %v965 = vpop.f32.mrf.mxu0
    %v966 = vpop.f32.mrf.mxu0
    %v967 = vpop.f32.mrf.mxu0
    %968 = vdwg.mxu0
    %v969 = vrcp.pop %v964
    %971 = vset.pattern.permute.xlu0 0
    %972 = vperm.xlu0 %971, %v969
    %v973 = vpop.permute.xlu0 %972
    %v975 = vmul.f32 %v924, %v973
    %v976 = vpack.c.bf16 %v975, %v975
    %v978 = vunpack.c.l.b16 %v976
    %v979 = vpack.c.b16 %v978, %v978
    %980 = vrot.lane.b32.xlu0 %v979, 96
    %v981 = vpop.permute.xlu0 %980
    %vm983 = vcmask 1044224
    %984 = vst.msk [vmem:[#allocation2] sm:$0xf] %vm983, %v981
    %v985 = vld [vmem:[%s6] sm:$0x1]
    %v986 = vld [vmem:[#allocation2] sm:$0xf]
    %v988 = vsel %vm391, %v985, 0
    %v991 = vsel %vm402, %v986, 0
    %993 = vmatprep.subr.bf16.mxu0 0
    %994 = vmatpush1.bf16.msra.mxu0 0
    %995 = vmatprep.subr.bf16.mxu0 0
    %996 = vmatpush1.bf16.msra.mxu0 0
    %997 = vmatprep.subr.bf16.mxu0 0
    %998 = vmatpush1.bf16.msra.mxu0 0
    %999 = vmatprep.subr.bf16.mxu0 0
    %1000 = vmatpush1.bf16.msra.mxu0 0
    %1001 = vmatprep.subr.bf16.mxu0 0
    %1002 = vmatpush1.bf16.msra.mxu0 0
    %1003 = vmatprep.subr.bf16.mxu0 0
    %1004 = vmatpush1.bf16.msra.mxu0 0
    %1005 = vmatprep.subr.bf16.mxu0 0
    %1006 = vmatpush1.bf16.msra.mxu0 0
    %1007 = vmatprep.subr.bf16.mxu0 0
    %1008 = vmatpush1.bf16.msra.mxu0 %v991
    %1009 = vmatprep.subr.bf16.mxu0 0
    %1010 = vmatpush2.bf16.msra.mxu0 0
    %1011 = vmatprep.subr.bf16.mxu0 0
    %1012 = vmatpush2.bf16.msra.mxu0 0
    %1013 = vmatprep.subr.bf16.mxu0 0
    %1014 = vmatpush2.bf16.msra.mxu0 0
    %1015 = vmatprep.subr.bf16.mxu0 0
    %1016 = vmatpush2.bf16.msra.mxu0 0
    %1017 = vmatprep.subr.bf16.mxu0 0
    %1018 = vmatpush2.bf16.msra.mxu0 0
    %1019 = vmatprep.subr.bf16.mxu0 0
    %1020 = vmatpush2.bf16.msra.mxu0 0
    %1021 = vmatprep.subr.bf16.mxu0 0
    %1022 = vmatpush2.bf16.msra.mxu0 0
    %1023 = vmatprep.subr.bf16.mxu0 0
    %1024 = vmatpush2.bf16.msra.mxu0 0
    %1025 = vmatprep.mubr.bf16.mxu0 0
    %1026 = vmatmul.mubr.bf16.gmra.mxu0 %v988
    %v1027 = vpop.f32.mrf.mxu0
    %v1028 = vadd.f32 0.0, %v1027
    %v1029 = vpop.f32.mrf.mxu0
    %v1030 = vpop.f32.mrf.mxu0
    %v1031 = vpop.f32.mrf.mxu0
    %1032 = vdwg.mxu0
    %v1033 = vpack.c.bf16 %v1028, %v1028
    %v1034 = vld [vmem:[#allocation9] sm:$0xf]
    %v1035 = vld [vmem:[#allocation9 + $0x4] sm:$0xf]
    %v1036 = vld [vmem:[#allocation9 + $0x8] sm:$0xf]
    %v1037 = vld [vmem:[#allocation9 + $0xc] sm:$0xf]
    %v1038 = vld [vmem:[#allocation9 + $0x10] sm:$0xf]
    %v1039 = vld [vmem:[#allocation9 + $0x14] sm:$0xf]
    %v1040 = vld [vmem:[#allocation9 + $0x18] sm:$0xf]
    %v1041 = vld [vmem:[#allocation9 + $0x1c] sm:$0xf]
    %v1042 = vld [vmem:[#allocation9 + $0x20] sm:$0xf]
    %v1043 = vld [vmem:[#allocation9 + $0x24] sm:$0xf]
    %v1044 = vld [vmem:[#allocation9 + $0x28] sm:$0xf]
    %v1045 = vld [vmem:[#allocation9 + $0x2c] sm:$0xf]
    %v1046 = vld [vmem:[#allocation9 + $0x30] sm:$0xf]
    %v1047 = vld [vmem:[#allocation9 + $0x34] sm:$0xf]
    %v1048 = vld [vmem:[#allocation9 + $0x38] sm:$0xf]
    %v1049 = vld [vmem:[#allocation9 + $0x3c] sm:$0xf]
    %v1050 = vld [vmem:[%s4] sm:$0x1]
    %v1052 = vlaneseq
    %v1053 = vshrl.u32 %v1052, 7
    %v1054 = vsub.s32 0, %v1053
    %v1055 = vrot.slane %v1050, %v1054
    %v1073 = vunpack.c.l.b16 %v1034
    %v1074 = vunpack.c.l.b16 %v1035
    %v1075 = vunpack.c.l.b16 %v1036
    %v1076 = vunpack.c.l.b16 %v1037
    %v1077 = vunpack.c.l.b16 %v1038
    %v1078 = vunpack.c.l.b16 %v1039
    %v1079 = vunpack.c.l.b16 %v1040
    %v1080 = vunpack.c.l.b16 %v1041
    %v1081 = vunpack.c.l.b16 %v1042
    %v1082 = vunpack.c.l.b16 %v1043
    %v1083 = vunpack.c.l.b16 %v1044
    %v1084 = vunpack.c.l.b16 %v1045
    %v1085 = vunpack.c.l.b16 %v1046
    %v1086 = vunpack.c.l.b16 %v1047
    %v1087 = vunpack.c.l.b16 %v1048
    %v1088 = vunpack.c.l.b16 %v1049
    %v1089 = vpack.c.b16 %v1074, %v1073
    %v1090 = vpack.c.b16 %v1076, %v1075
    %v1091 = vpack.c.b16 %v1078, %v1077
    %v1092 = vpack.c.b16 %v1080, %v1079
    %v1093 = vpack.c.b16 %v1082, %v1081
    %v1094 = vpack.c.b16 %v1084, %v1083
    %v1095 = vpack.c.b16 %v1086, %v1085
    %v1096 = vpack.c.b16 %v1088, %v1087
    %1105 = vmatprep.subr.bf16.mxu0 0
    %1106 = vmatpush1.bf16.msra.mxu0 %v1096
    %1107 = vmatprep.subr.bf16.mxu0 0
    %1108 = vmatpush1.bf16.msra.mxu0 %v1095
    %1109 = vmatprep.subr.bf16.mxu0 0
    %1110 = vmatpush1.bf16.msra.mxu0 %v1094
    %1111 = vmatprep.subr.bf16.mxu0 0
    %1112 = vmatpush1.bf16.msra.mxu0 %v1093
    %1113 = vmatprep.subr.bf16.mxu0 0
    %1114 = vmatpush1.bf16.msra.mxu0 %v1092
    %1115 = vmatprep.subr.bf16.mxu0 0
    %1116 = vmatpush1.bf16.msra.mxu0 %v1091
    %1117 = vmatprep.subr.bf16.mxu0 0
    %1118 = vmatpush1.bf16.msra.mxu0 %v1090
    %1119 = vmatprep.subr.bf16.mxu0 0
    %1120 = vmatpush1.bf16.msra.mxu0 %v1089
    %1121 = vmatprep.subr.bf16.mxu0 0
    %1122 = vmatpush2.bf16.msra.mxu0 0
    %1123 = vmatprep.subr.bf16.mxu0 0
    %1124 = vmatpush2.bf16.msra.mxu0 0
    %1125 = vmatprep.subr.bf16.mxu0 0
    %1126 = vmatpush2.bf16.msra.mxu0 0
    %1127 = vmatprep.subr.bf16.mxu0 0
    %1128 = vmatpush2.bf16.msra.mxu0 0
    %1129 = vmatprep.subr.bf16.mxu0 0
    %1130 = vmatpush2.bf16.msra.mxu0 0
    %1131 = vmatprep.subr.bf16.mxu0 0
    %1132 = vmatpush2.bf16.msra.mxu0 0
    %1133 = vmatprep.subr.bf16.mxu0 0
    %1134 = vmatpush2.bf16.msra.mxu0 0
    %1135 = vmatprep.subr.bf16.mxu0 0
    %1136 = vmatpush2.bf16.msra.mxu0 0
    %1137 = vmatprep.mubr.bf16.mxu0 0
    %1138 = vmatmul.mubr.bf16.gmra.mxu0 %v1033
    %v1139 = vpop.f32.mrf.mxu0
    %v1140 = vadd.f32 %v1055, %v1139
    %v1141 = vpop.f32.mrf.mxu0
    %v1142 = vpop.f32.mrf.mxu0
    %v1143 = vpop.f32.mrf.mxu0
    %1144 = vdwg.mxu0
    %1145 = vst [vmem:[#allocation11] sm:$0x3] %v1140
    // Predicated region
    $region46: #{tpu_custom_call.1} parent=1 // pred_check
      _
    $region47: #{tpu_custom_call.1} parent=1 // pred_check_branch
      %1147 = sbr.rel (0) target = $region49
    $region48: #{tpu_custom_call.1} parent=1 // pred_region
      %s1149 = ssub.s32 32, 32
      %1150 = vsyncadd [#allocation5], %s1149
      %s1152 = sshll.u32 [#allocation11], 4
      %s1153 = int_to_ptr.vmem [resolvable:$true] %s1152
      %1155 = dma.vmem_to_hbm [thread:$0]  %s1153, 32, %s7, [#allocation5]
    $region49: #{tpu_custom_call.1} parent=1 // pred_fallthru
      _
    // Predicated region
    $region50: #{tpu_custom_call.1} parent=1 // pred_check
      _
    $region51: #{tpu_custom_call.1} parent=1 // pred_check_branch
      %1157 = sbr.rel (0) target = $region53
    $region52: #{tpu_custom_call.1} parent=1 // pred_region
      %1158 = dma.done [#allocation5], 32
    $region53: #{tpu_custom_call.1} parent=1 // pred_fallthru
      _
    %1159 = vsyncpa [#allocation4], 1
    %1160 = vsyncpa [#allocation7], 1
    %1161 = vsyncpa [#allocation10], 1
    %1162 = vsyncpa [#allocation5], 1

</llo_original>
